<compile_context>
chip_gen: v7x
topology: tpu7x:2x2x1
jax: 0.10.0
libtpu: 0.0.40
codegen_flags: <defaults>
</compile_context>

<pallas_src>
import functools

import jax
import jax.numpy as jnp
from jax import lax
from jax.experimental import pallas as pl
from jax.experimental.pallas import tpu as pltpu


def _sigmoid_via_tanh(x):
    # sigmoid(x) == 0.5 * tanh(0.5 * x) + 0.5  : one EUP op instead of exp+recip.
    return 0.5 * jnp.tanh(0.5 * x) + 0.5


def _convlstm_cell_kernel(p_ref, c_ref, w_ref, b_ref, h_out_ref, c_out_ref,
                          acc_ref):
    """One batch element per grid step.

    p_ref     : (1, K, H*W)    bf16 im2col patches, K = Cin*KH*KW
    c_ref     : (1, hid, H*W)  f32 current cell state (channel-major)
    w_ref     : (4*hid, K)     bf16 flattened conv weight (row-major OIHW)
    b_ref     : (4*hid, 1)     f32 conv bias
    h_out_ref : (1, hid, H*W)  f32
    c_out_ref : (1, hid, H*W)  f32
    acc_ref   : (4*hid, H*W)   f32 VMEM scratch holding the conv result
    """
    hid = c_ref.shape[1]

    # Single MXU matmul (M=4*hid, K=Cin*KH*KW, N=H*W); bias folded into store.
    acc_ref[...] = (
        jnp.dot(w_ref[...], p_ref[0], preferred_element_type=jnp.float32)
        + b_ref[...])

    c_cur = c_ref[0]

    # Gate order follows torch.split(combined_conv, hidden_dim, dim=1):
    # rows [0:hid]=i, [hid:2hid]=f, [2hid:3hid]=o, [3hid:4hid]=g.
    f = _sigmoid_via_tanh(acc_ref[pl.ds(1 * hid, hid), :])
    c_next = f * c_cur
    i = _sigmoid_via_tanh(acc_ref[pl.ds(0 * hid, hid), :])
    g = jnp.tanh(acc_ref[pl.ds(3 * hid, hid), :])
    c_next = c_next + i * g
    c_out_ref[0] = c_next.astype(c_out_ref.dtype)

    o = _sigmoid_via_tanh(acc_ref[pl.ds(2 * hid, hid), :])
    h_out_ref[0] = (o * jnp.tanh(c_next)).astype(h_out_ref.dtype)


def convlstm_cell_forward(x_nchw, h_nchw, c_nchw, weight_oihw, bias,
                          kernel_size=(3, 3)):
    """ConvLSTMCell.forward. Inputs/outputs are NCHW f32 to match PyTorch."""
    B, Ci, H, W = x_nchw.shape
    hid = h_nchw.shape[1]
    KH, KW = kernel_size
    ph, pw = KH // 2, KW // 2
    Cin = Ci + hid
    K = Cin * KH * KW
    HW = H * W
    out_c = 4 * hid

    # --- NCHW-native glue (no layout transposes) ----------------------------
    # im2col in the wrapper so the kernel sees a clean (K, H*W) operand per
    # batch element; patches are bf16 to halve DMA bytes / double MXU density.
    comb = jnp.concatenate([x_nchw, h_nchw], axis=1).astype(jnp.bfloat16)
    comb = jnp.pad(comb, ((0, 0), (0, 0), (ph, ph), (pw, pw)))
    wins = [comb[:, :, ky:ky + H, kx:kx + W]
            for ky in range(KH) for kx in range(KW)]
    # (B, Cin, KH*KW, H, W) -> (B, Cin*KH*KW, H*W); row index = c*KH*KW+ky*KW+kx,
    # matching weight_oihw.reshape(out_c, K) column order.
    patches = jnp.stack(wins, axis=2).reshape(B, K, HW)

    w_mat = weight_oihw.reshape(out_c, K).astype(jnp.bfloat16)
    b_col = bias.reshape(out_c, 1).astype(jnp.float32)
    c_flat = c_nchw.reshape(B, hid, HW).astype(jnp.float32)

    # TODO(synk): for production frame sizes, add a spatial row-strip grid axis
    # with a KH-1 halo and stage im2col into VMEM inside the kernel so the 9x
    # patches array never hits HBM and v7x's 64 MiB VMEM budget is respected.
    h_next, c_next = pl.pallas_call(
        _convlstm_cell_kernel,
        out_shape=(jax.ShapeDtypeStruct((B, hid, HW), jnp.float32),
                   jax.ShapeDtypeStruct((B, hid, HW), jnp.float32)),
        grid_spec=pltpu.PrefetchScalarGridSpec(
            num_scalar_prefetch=0,
            grid=(B,),
            in_specs=[
                pl.BlockSpec((1, K, HW), lambda b: (b, 0, 0)),
                pl.BlockSpec((1, hid, HW), lambda b: (b, 0, 0)),
                pl.BlockSpec((out_c, K), lambda b: (0, 0)),   # weights resident
                pl.BlockSpec((out_c, 1), lambda b: (0, 0)),   # bias resident
            ],
            out_specs=[
                pl.BlockSpec((1, hid, HW), lambda b: (b, 0, 0)),
                pl.BlockSpec((1, hid, HW), lambda b: (b, 0, 0)),
            ],
            scratch_shapes=[pltpu.VMEM((out_c, HW), jnp.float32)],
        ),
        compiler_params=pltpu.CompilerParams(
            dimension_semantics=("parallel",)),
    )(patches, c_flat, w_mat, b_col)

    # Free reshapes back to NCHW (identical memory layout).
    return h_next.reshape(B, hid, H, W), c_next.reshape(B, hid, H, W)


def _reference_forward(x, h, c, w_oihw, bias, kernel_size=(3, 3)):
    """Pure-JAX f32 NCHW reference mirroring the PyTorch module."""
    KH, KW = kernel_size
    combined = jnp.concatenate([x, h], axis=1)
    conv = lax.conv_general_dilated(
        combined.astype(jnp.float32), w_oihw.astype(jnp.float32),
        window_strides=(1, 1), padding=((KH // 2, KH // 2), (KW // 2, KW // 2)),
        dimension_numbers=("NCHW", "OIHW", "NCHW"))
    conv = conv + bias.reshape(1, -1, 1, 1)
    hid = h.shape[1]
    cc_i, cc_f, cc_o, cc_g = jnp.split(conv, [hid, 2 * hid, 3 * hid], axis=1)
    i = jax.nn.sigmoid(cc_i)
    f = jax.nn.sigmoid(cc_f)
    o = jax.nn.sigmoid(cc_o)
    g = jnp.tanh(cc_g)
    c_next = f * c + i * g
    h_next = o * jnp.tanh(c_next)
    return h_next, c_next


if __name__ == "__main__":
    # Shapes consistent with the PyTorch module's forward.
    B, input_dim, hidden_dim, H, W = 2, 4, 32, 16, 16
    kernel_size = (3, 3)

    key = jax.random.PRNGKey(0)
    kx, kh, kc, kw, kb = jax.random.split(key, 5)

    x = jax.random.normal(kx, (B, input_dim, H, W), dtype=jnp.float32)      # NCHW
    h_cur = jax.random.normal(kh, (B, hidden_dim, H, W), dtype=jnp.float32)
    c_cur = jax.random.normal(kc, (B, hidden_dim, H, W), dtype=jnp.float32)

    # nn.Conv2d weight shape: (4*hid, Cin, KH, KW), bias: (4*hid,)
    Cin = input_dim + hidden_dim
    weight = 0.05 * jax.random.normal(
        kw, (4 * hidden_dim, Cin, kernel_size[0], kernel_size[1]), jnp.float32)
    bias = 0.05 * jax.random.normal(kb, (4 * hidden_dim,), jnp.float32)

    fwd = jax.jit(functools.partial(convlstm_cell_forward,
                                    kernel_size=kernel_size))
    h_next, c_next = fwd(x, h_cur, c_cur, weight, bias)
    jax.block_until_ready((h_next, c_next))

    h_ref, c_ref = _reference_forward(x, h_cur, c_cur, weight, bias, kernel_size)
    assert h_next.shape == (B, hidden_dim, H, W)
    assert c_next.shape == (B, hidden_dim, H, W)
    # bf16 MXU inputs -> looser tolerance than a pure-f32 comparison.
    assert jnp.allclose(h_next, h_ref, atol=8e-2, rtol=8e-2)
    assert jnp.allclose(c_next, c_ref, atol=8e-2, rtol=8e-2)

    print("KERNEL_OK")
</pallas_src>

<mosaic_0001>
module attributes {stable_mosaic.version = 11 : i64} {
  func.func @_convlstm_cell_kernel(%arg0: i32, %arg1: memref<1x324x256xbf16, #tpu.memory_space<vmem>>, %arg2: memref<1x32x256xf32, #tpu.memory_space<vmem>>, %arg3: memref<128x324xbf16, #tpu.memory_space<vmem>>, %arg4: memref<128x1xf32, #tpu.memory_space<vmem>>, %arg5: memref<1x32x256xf32, #tpu.memory_space<vmem>>, %arg6: memref<1x32x256xf32, #tpu.memory_space<vmem>>, %arg7: memref<128x256xf32, #tpu.memory_space<vmem>>) attributes {dimension_semantics = [#tpu.dimension_semantics<parallel>], iteration_bounds = array<i64: 2>, scalar_prefetch = 0 : i64, scratch_operands = 1 : i64, tpu.core_type = #tpu.core_type<tc>, window_params = [{transform_indices = @transform_0, window_bounds = array<i64: 1, 324, 256>}, {transform_indices = @transform_1, window_bounds = array<i64: 1, 32, 256>}, {pipeline_mode = #tpu.pipeline_mode<synchronous>, transform_indices = @transform_2, window_bounds = array<i64: 128, 324>}, {pipeline_mode = #tpu.pipeline_mode<synchronous>, transform_indices = @transform_3, window_bounds = array<i64: 128, 1>}, {transform_indices = @transform_4, window_bounds = array<i64: 1, 32, 256>}, {transform_indices = @transform_5, window_bounds = array<i64: 1, 32, 256>}]} {
    %c0 = arith.constant 0 : index
    %c0_0 = arith.constant 0 : index
    %0 = vector.load %arg3[%c0, %c0_0] : memref<128x324xbf16, #tpu.memory_space<vmem>>, vector<128x324xbf16>
    %c0_1 = arith.constant 0 : index
    %c0_2 = arith.constant 0 : index
    %c0_3 = arith.constant 0 : index
    %1 = vector.load %arg1[%c0_1, %c0_2, %c0_3] : memref<1x324x256xbf16, #tpu.memory_space<vmem>>, vector<1x324x256xbf16>
    %2 = vector.shape_cast %1 : vector<1x324x256xbf16> to vector<324x256xbf16>
    %cst = arith.constant dense<0.000000e+00> : vector<128x256xf32>
    %3 = tpu.matmul %0, %2, %cst {dimension_numbers = #tpu.dot_dimension_numbers<[1], [0], [0], [1], [0, 0, 1, 1], [], []>} : vector<128x324xbf16>, vector<324x256xbf16>, vector<128x256xf32> -> vector<128x256xf32>
    %c0_4 = arith.constant 0 : index
    %c0_5 = arith.constant 0 : index
    %4 = vector.load %arg4[%c0_4, %c0_5] : memref<128x1xf32, #tpu.memory_space<vmem>>, vector<128x1xf32>
    %5 = vector.broadcast %4 : vector<128x1xf32> to vector<128x256xf32>
    %6 = arith.addf %3, %5 : vector<128x256xf32>
    %c0_6 = arith.constant 0 : index
    %c0_7 = arith.constant 0 : index
    %7 = vector.load %arg7[%c0_6, %c0_7] : memref<128x256xf32, #tpu.memory_space<vmem>>, vector<128x256xf32>
    tpu.vector_store %arg7[%c0_6, %c0_7], %6 {strides = array<i32>} : memref<128x256xf32, #tpu.memory_space<vmem>>, vector<128x256xf32>,
    %c0_8 = arith.constant 0 : index
    %c0_9 = arith.constant 0 : index
    %c0_10 = arith.constant 0 : index
    %8 = vector.load %arg2[%c0_8, %c0_9, %c0_10] : memref<1x32x256xf32, #tpu.memory_space<vmem>>, vector<1x32x256xf32>
    %9 = vector.shape_cast %8 : vector<1x32x256xf32> to vector<32x256xf32>
    %c32 = arith.constant 32 : index
    %c0_11 = arith.constant 0 : index
    %10 = vector.load %arg7[%c32, %c0_11] : memref<128x256xf32, #tpu.memory_space<vmem>>, vector<32x256xf32>
    %cst_12 = arith.constant 5.000000e-01 : f32
    %11 = vector.broadcast %cst_12 : f32 to vector<32x256xf32>
    %12 = arith.mulf %11, %10 : vector<32x256xf32>
    %13 = math.tanh %12 : vector<32x256xf32>
    %cst_13 = arith.constant 5.000000e-01 : f32
    %14 = vector.broadcast %cst_13 : f32 to vector<32x256xf32>
    %15 = arith.mulf %14, %13 : vector<32x256xf32>
    %cst_14 = arith.constant 5.000000e-01 : f32
    %16 = vector.broadcast %cst_14 : f32 to vector<32x256xf32>
    %17 = arith.addf %15, %16 : vector<32x256xf32>
    %18 = arith.mulf %17, %9 : vector<32x256xf32>
    %c0_15 = arith.constant 0 : index
    %c0_16 = arith.constant 0 : index
    %19 = vector.load %arg7[%c0_15, %c0_16] : memref<128x256xf32, #tpu.memory_space<vmem>>, vector<32x256xf32>
    %cst_17 = arith.constant 5.000000e-01 : f32
    %20 = vector.broadcast %cst_17 : f32 to vector<32x256xf32>
    %21 = arith.mulf %20, %19 : vector<32x256xf32>
    %22 = math.tanh %21 : vector<32x256xf32>
    %cst_18 = arith.constant 5.000000e-01 : f32
    %23 = vector.broadcast %cst_18 : f32 to vector<32x256xf32>
    %24 = arith.mulf %23, %22 : vector<32x256xf32>
    %cst_19 = arith.constant 5.000000e-01 : f32
    %25 = vector.broadcast %cst_19 : f32 to vector<32x256xf32>
    %26 = arith.addf %24, %25 : vector<32x256xf32>
    %c96 = arith.constant 96 : index
    %c0_20 = arith.constant 0 : index
    %27 = vector.load %arg7[%c96, %c0_20] : memref<128x256xf32, #tpu.memory_space<vmem>>, vector<32x256xf32>
    %28 = math.tanh %27 : vector<32x256xf32>
    %29 = arith.mulf %26, %28 : vector<32x256xf32>
    %30 = arith.addf %18, %29 : vector<32x256xf32>
    %c0_21 = arith.constant 0 : index
    %c0_22 = arith.constant 0 : index
    %c0_23 = arith.constant 0 : index
    %31 = vector.load %arg6[%c0_21, %c0_22, %c0_23] : memref<1x32x256xf32, #tpu.memory_space<vmem>>, vector<1x32x256xf32>
    %32 = vector.shape_cast %31 : vector<1x32x256xf32> to vector<32x256xf32>
    %33 = vector.shape_cast %30 : vector<32x256xf32> to vector<1x32x256xf32>
    tpu.vector_store %arg6[%c0_21, %c0_22, %c0_23], %33 {strides = array<i32>} : memref<1x32x256xf32, #tpu.memory_space<vmem>>, vector<1x32x256xf32>,
    %c64 = arith.constant 64 : index
    %c0_24 = arith.constant 0 : index
    %34 = vector.load %arg7[%c64, %c0_24] : memref<128x256xf32, #tpu.memory_space<vmem>>, vector<32x256xf32>
    %cst_25 = arith.constant 5.000000e-01 : f32
    %35 = vector.broadcast %cst_25 : f32 to vector<32x256xf32>
    %36 = arith.mulf %35, %34 : vector<32x256xf32>
    %37 = math.tanh %36 : vector<32x256xf32>
    %cst_26 = arith.constant 5.000000e-01 : f32
    %38 = vector.broadcast %cst_26 : f32 to vector<32x256xf32>
    %39 = arith.mulf %38, %37 : vector<32x256xf32>
    %cst_27 = arith.constant 5.000000e-01 : f32
    %40 = vector.broadcast %cst_27 : f32 to vector<32x256xf32>
    %41 = arith.addf %39, %40 : vector<32x256xf32>
    %42 = math.tanh %30 : vector<32x256xf32>
    %43 = arith.mulf %41, %42 : vector<32x256xf32>
    %c0_28 = arith.constant 0 : index
    %c0_29 = arith.constant 0 : index
    %c0_30 = arith.constant 0 : index
    %44 = vector.load %arg5[%c0_28, %c0_29, %c0_30] : memref<1x32x256xf32, #tpu.memory_space<vmem>>, vector<1x32x256xf32>
    %45 = vector.shape_cast %44 : vector<1x32x256xf32> to vector<32x256xf32>
    %46 = vector.shape_cast %43 : vector<32x256xf32> to vector<1x32x256xf32>
    tpu.vector_store %arg5[%c0_28, %c0_29, %c0_30], %46 {strides = array<i32>} : memref<1x32x256xf32, #tpu.memory_space<vmem>>, vector<1x32x256xf32>,
    return
  }
  func.func @transform_0(%arg0: i32) -> (i32, i32, i32) {
    %c0_i32 = arith.constant 0 : i32
    %c0_i32_0 = arith.constant 0 : i32
    %c0_i32_1 = arith.constant 0 : i32
    return %arg0, %c0_i32, %c0_i32_0 : i32, i32, i32
  }
  func.func @transform_1(%arg0: i32) -> (i32, i32, i32) {
    %c0_i32 = arith.constant 0 : i32
    %c0_i32_0 = arith.constant 0 : i32
    %c0_i32_1 = arith.constant 0 : i32
    return %arg0, %c0_i32, %c0_i32_0 : i32, i32, i32
  }
  func.func @transform_2(%arg0: i32) -> (i32, i32) {
    %c0_i32 = arith.constant 0 : i32
    %c0_i32_0 = arith.constant 0 : i32
    %c0_i32_1 = arith.constant 0 : i32
    return %c0_i32, %c0_i32_0 : i32, i32
  }
  func.func @transform_3(%arg0: i32) -> (i32, i32) {
    %c0_i32 = arith.constant 0 : i32
    %c0_i32_0 = arith.constant 0 : i32
    %c0_i32_1 = arith.constant 0 : i32
    return %c0_i32, %c0_i32_0 : i32, i32
  }
  func.func @transform_4(%arg0: i32) -> (i32, i32, i32) {
    %c0_i32 = arith.constant 0 : i32
    %c0_i32_0 = arith.constant 0 : i32
    %c0_i32_1 = arith.constant 0 : i32
    return %arg0, %c0_i32, %c0_i32_0 : i32, i32, i32
  }
  func.func @transform_5(%arg0: i32) -> (i32, i32, i32) {
    %c0_i32 = arith.constant 0 : i32
    %c0_i32_0 = arith.constant 0 : i32
    %c0_i32_1 = arith.constant 0 : i32
    return %arg0, %c0_i32, %c0_i32_0 : i32, i32, i32
  }
}

</mosaic_0001>

<llo_original>
// kernel: convlstm_cell_forward.1
$region0: #{convlstm_cell_forward.1}
  #allocation0 [shape = 'u32[]', space=smem, size = 0x4, offset = 0x4, fixed_abs, tag = 'smem constant byte address 0x4 - core index']
  #allocation1 [shape = 'u32[144,128]{1,0:T(1,128)}', space=vmem, size = 0x12000, scoped, tag = 'internal scratch']
  #allocation2 [shape = 'f32[128,256]{1,0:T(8,128)}', space=vmem, size = 0x20000, scoped, tag = 'scratch operand']
  %s0 = inlined_call_operand.vmem [shape: bf16[2,324,256], index: 0, kind: input, shape index: {}]
  %s1 = inlined_call_operand.vmem [shape: f32[2,32,256], index: 1, kind: input, shape index: {}]
  %s2 = inlined_call_operand.vmem [shape: bf16[128,324], index: 2, kind: input, shape index: {}]
  %s3 = inlined_call_operand.vmem [shape: f32[128,1], index: 3, kind: input, shape index: {}]
  %s4 = inlined_call_operand.vmem [shape: f32[2,32,256], index: 4, kind: output, shape index: {0}]
  %s5 = inlined_call_operand.vmem [shape: f32[2,32,256], index: 5, kind: output, shape index: {1}]
  %6 = xla_tuple %s4, %s5
  %s7 = sld [smem:[#allocation0]]
  $region57: #{convlstm_cell_forward.1} parent=0
    _
  %s9 = ssub.s32 1, %s7
  %s10 = scalar_select 0, %s9, %s7
  loop: start=0, step=1, limit=4
  $region2: #{convlstm_cell_forward.1} parent=0 // loop_pre_header
    _
  $region3: #{convlstm_cell_forward.1} parent=0 // loop_header
    %s12 = sphi 0, %s16
    %p13 = scmp.ge.s32.totalorder %s12, 4
    %s22 = sphi 0, %s24
    %s25 = sphi 0, %s22
    %s26 = sphi 0, %s25
    %s42 = sphi 0, %s26
    %s48 = sphi 0, %s50
    %s51 = sphi 0, %s48
    %s52 = sphi 0, %s51
    %s68 = sphi 0, %s52
    %s72 = sphi 0, %s72
    %s74 = sphi 0, %s72
    %s75 = sphi 0, %s74
    %s89 = sphi 0, %s75
    %s93 = sphi 0, %s93
    %s95 = sphi 0, %s93
    %s96 = sphi 0, %s95
    %s110 = sphi 0, %s96
    %s116 = sphi 0, %s118
    %s119 = sphi 0, %s116
    %s120 = sphi 0, %s119
    %s136 = sphi 0, %s120
    %s142 = sphi 0, %s144
    %s145 = sphi 0, %s142
    %s146 = sphi 0, %s145
    %s162 = sphi 0, %s146
  $region4: #{convlstm_cell_forward.1} parent=0 // loop_header_branch
    %15 = sbr.rel (%p13) target = $region8
  $region5: #{convlstm_cell_forward.1} parent=0 // loop_body
    %s17 = ssub.s32 %s12, 1
    %s18 = ssub.s32 %s12, 2
    %s19 = sadd.s32 %s12, 1
    %s20 = ssub.s32 %s12, %s19
    %p21 = scmp.eq.s32.totalorder %s20, 0
    %s23 = sadd.s32 %s22, 1
    %s24 = scalar_select %p21, %s22, %s23
    %p27 = pneg %p21
    %p28 = scmp.eq.s32.totalorder %s12, 1
    %p29 = por %p27, %p28
    %p30 = scmp.ne.s32.totalorder %s22, %s25
    %p31 = scmp.eq.s32.totalorder %s12, 0
    %p32 = por %p30, %p31
    %p33 = scmp.ne.s32.totalorder %s22, %s25
    %p34 = scmp.eq.s32.totalorder %s17, 1
    %p35 = por %p33, %p34
    %p36 = scmp.ne.s32.totalorder %s25, %s26
    %p37 = scmp.eq.s32.totalorder %s17, 0
    %p38 = por %p36, %p37
    %p39 = scmp.ne.s32.totalorder %s25, %s26
    %p40 = scmp.eq.s32.totalorder %s18, 1
    %p41 = por %p39, %p40
    %p43 = scmp.ne.s32.totalorder %s26, %s42
    %p44 = scmp.eq.s32.totalorder %s18, 0
    %p45 = por %p43, %p44
    %s46 = ssub.s32 %s12, %s19
    %p47 = scmp.eq.s32.totalorder %s46, 0
    %s49 = sadd.s32 %s48, 1
    %s50 = scalar_select %p47, %s48, %s49
    %p53 = pneg %p47
    %p54 = scmp.eq.s32.totalorder %s12, 1
    %p55 = por %p53, %p54
    %p56 = scmp.ne.s32.totalorder %s48, %s51
    %p57 = scmp.eq.s32.totalorder %s12, 0
    %p58 = por %p56, %p57
    %p59 = scmp.ne.s32.totalorder %s48, %s51
    %p60 = scmp.eq.s32.totalorder %s17, 1
    %p61 = por %p59, %p60
    %p62 = scmp.ne.s32.totalorder %s51, %s52
    %p63 = scmp.eq.s32.totalorder %s17, 0
    %p64 = por %p62, %p63
    %p65 = scmp.ne.s32.totalorder %s51, %s52
    %p66 = scmp.eq.s32.totalorder %s18, 1
    %p67 = por %p65, %p66
    %p69 = scmp.ne.s32.totalorder %s52, %s68
    %p70 = scmp.eq.s32.totalorder %s18, 0
    %p71 = por %p69, %p70
    %s73 = sadd.s32 %s72, 1
    %p76 = scmp.eq.s32.totalorder %s12, 1
    %p77 = scmp.ne.s32.totalorder %s72, %s74
    %p78 = scmp.eq.s32.totalorder %s12, 0
    %p79 = por %p77, %p78
    %p80 = scmp.ne.s32.totalorder %s72, %s74
    %p81 = scmp.eq.s32.totalorder %s17, 1
    %p82 = por %p80, %p81
    %p83 = scmp.ne.s32.totalorder %s74, %s75
    %p84 = scmp.eq.s32.totalorder %s17, 0
    %p85 = por %p83, %p84
    %p86 = scmp.ne.s32.totalorder %s74, %s75
    %p87 = scmp.eq.s32.totalorder %s18, 1
    %p88 = por %p86, %p87
    %p90 = scmp.ne.s32.totalorder %s75, %s89
    %p91 = scmp.eq.s32.totalorder %s18, 0
    %p92 = por %p90, %p91
    %s94 = sadd.s32 %s93, 1
    %p97 = scmp.eq.s32.totalorder %s12, 1
    %p98 = scmp.ne.s32.totalorder %s93, %s95
    %p99 = scmp.eq.s32.totalorder %s12, 0
    %p100 = por %p98, %p99
    %p101 = scmp.ne.s32.totalorder %s93, %s95
    %p102 = scmp.eq.s32.totalorder %s17, 1
    %p103 = por %p101, %p102
    %p104 = scmp.ne.s32.totalorder %s95, %s96
    %p105 = scmp.eq.s32.totalorder %s17, 0
    %p106 = por %p104, %p105
    %p107 = scmp.ne.s32.totalorder %s95, %s96
    %p108 = scmp.eq.s32.totalorder %s18, 1
    %p109 = por %p107, %p108
    %p111 = scmp.ne.s32.totalorder %s96, %s110
    %p112 = scmp.eq.s32.totalorder %s18, 0
    %p113 = por %p111, %p112
    %s114 = ssub.s32 %s12, %s19
    %p115 = scmp.eq.s32.totalorder %s114, 0
    %s117 = sadd.s32 %s116, 1
    %s118 = scalar_select %p115, %s116, %s117
    %p121 = pneg %p115
    %p122 = scmp.eq.s32.totalorder %s12, 1
    %p123 = por %p121, %p122
    %p124 = scmp.ne.s32.totalorder %s116, %s119
    %p125 = scmp.eq.s32.totalorder %s12, 0
    %p126 = por %p124, %p125
    %p127 = scmp.ne.s32.totalorder %s116, %s119
    %p128 = scmp.eq.s32.totalorder %s17, 1
    %p129 = por %p127, %p128
    %p130 = scmp.ne.s32.totalorder %s119, %s120
    %p131 = scmp.eq.s32.totalorder %s17, 0
    %p132 = por %p130, %p131
    %p133 = scmp.ne.s32.totalorder %s119, %s120
    %p134 = scmp.eq.s32.totalorder %s18, 1
    %p135 = por %p133, %p134
    %p137 = scmp.ne.s32.totalorder %s120, %s136
    %p138 = scmp.eq.s32.totalorder %s18, 0
    %p139 = por %p137, %p138
    %s140 = ssub.s32 %s12, %s19
    %p141 = scmp.eq.s32.totalorder %s140, 0
    %s143 = sadd.s32 %s142, 1
    %s144 = scalar_select %p141, %s142, %s143
    %p147 = pneg %p141
    %p148 = scmp.eq.s32.totalorder %s12, 1
    %p149 = por %p147, %p148
    %p150 = scmp.ne.s32.totalorder %s142, %s145
    %p151 = scmp.eq.s32.totalorder %s12, 0
    %p152 = por %p150, %p151
    %p153 = scmp.ne.s32.totalorder %s142, %s145
    %p154 = scmp.eq.s32.totalorder %s17, 1
    %p155 = por %p153, %p154
    %p156 = scmp.ne.s32.totalorder %s145, %s146
    %p157 = scmp.eq.s32.totalorder %s17, 0
    %p158 = por %p156, %p157
    %p159 = scmp.ne.s32.totalorder %s145, %s146
    %p160 = scmp.eq.s32.totalorder %s18, 1
    %p161 = por %p159, %p160
    %p163 = scmp.ne.s32.totalorder %s146, %s162
    %p164 = scmp.eq.s32.totalorder %s18, 0
    %p165 = por %p163, %p164
    %p166 = scmp.le.s32.totalorder 1, %s12
    %p167 = scmp.lt.s32.totalorder %s12, 3
    %p168 = pnand %p166, %p167
    %p169 = pneg %p168
    // Predicated region
    $region9: #{convlstm_cell_forward.1} parent=5 // pred_check
      _
    $region10: #{convlstm_cell_forward.1} parent=5 // pred_check_branch
      %171 = sbr.rel (%p168) target = $region12
    $region11: #{convlstm_cell_forward.1} parent=5 // pred_region
      %s172 = ssub.s32 %s12, 1
      // Predicated region
      $region13: #{convlstm_cell_forward.1} parent=11 // pred_check
        %p173 = pneg %p85
      $region14: #{convlstm_cell_forward.1} parent=11 // pred_check_branch
        %175 = sbr.rel (%p173) target = $region16
      $region15: #{convlstm_cell_forward.1} parent=11 // pred_region
        _
      $region16: #{convlstm_cell_forward.1} parent=11 // pred_fallthru
        _
      // Predicated region
      $region17: #{convlstm_cell_forward.1} parent=11 // pred_check
        %p176 = pneg %p106
      $region18: #{convlstm_cell_forward.1} parent=11 // pred_check_branch
        %178 = sbr.rel (%p176) target = $region20
      $region19: #{convlstm_cell_forward.1} parent=11 // pred_region
        _
      $region20: #{convlstm_cell_forward.1} parent=11 // pred_fallthru
        _
    $region12: #{convlstm_cell_forward.1} parent=5 // pred_fallthru
      _
    %p179 = scmp.lt.s32.totalorder %s12, 2
    // Predicated region
    $region21: #{convlstm_cell_forward.1} parent=5 // pred_check
      %p180 = pneg %p179
    $region22: #{convlstm_cell_forward.1} parent=5 // pred_check_branch
      %182 = sbr.rel (%p180) target = $region24
    $region23: #{convlstm_cell_forward.1} parent=5 // pred_region
      // Predicated region
      $region25: #{convlstm_cell_forward.1} parent=23 // pred_check
        %p183 = pneg %p32
      $region26: #{convlstm_cell_forward.1} parent=23 // pred_check_branch
        %185 = sbr.rel (%p183) target = $region28
      $region27: #{convlstm_cell_forward.1} parent=23 // pred_region
        %p186 = scmp.lt.s32.totalorder %s12, 1
        %s187 = scalar_select %p186, %s12, 1
        %s188 = smul.addr %s187, 82
        %s189 = smul.addr %s188, 4
        %s190 = scalar_lea.vmem %s0, %s189
      $region28: #{convlstm_cell_forward.1} parent=23 // pred_fallthru
        _
      // Predicated region
      $region29: #{convlstm_cell_forward.1} parent=23 // pred_check
        %p191 = pneg %p58
      $region30: #{convlstm_cell_forward.1} parent=23 // pred_check_branch
        %193 = sbr.rel (%p191) target = $region32
      $region31: #{convlstm_cell_forward.1} parent=23 // pred_region
        %p194 = scmp.lt.s32.totalorder %s12, 1
        %s195 = scalar_select %p194, %s12, 1
        %s196 = smul.addr %s195, 8
        %s197 = smul.addr %s196, 8
        %s198 = scalar_lea.vmem %s1, %s197
      $region32: #{convlstm_cell_forward.1} parent=23 // pred_fallthru
        _
    $region24: #{convlstm_cell_forward.1} parent=5 // pred_fallthru
      _
    %p199 = scmp.le.s32.totalorder 1, %s12
    %p200 = scmp.lt.s32.totalorder %s12, 3
    %p201 = pnand %p199, %p200
    %p202 = pneg %p201
    // Predicated region
    $region33: #{convlstm_cell_forward.1} parent=5 // pred_check
      _
    $region34: #{convlstm_cell_forward.1} parent=5 // pred_check_branch
      %204 = sbr.rel (%p201) target = $region36
    $region35: #{convlstm_cell_forward.1} parent=5 // pred_region
      %s205 = ssub.s32 %s12, 1
      %p206 = scmp.lt.s32.totalorder %s17, 1
      %s207 = scalar_select %p206, %s17, 1
      %s208 = smul.addr %s207, 82
      %s209 = smul.addr %s208, 4
      %s210 = scalar_lea.vmem %s0, %s209
      %p211 = pneg %p38
      %p212 = pneg %p35
      %p213 = scmp.lt.s32.totalorder %s17, 1
      %s214 = scalar_select %p213, %s17, 1
      %s215 = smul.addr %s214, 8
      %s216 = smul.addr %s215, 8
      %s217 = scalar_lea.vmem %s1, %s216
      %p218 = pneg %p64
      %p219 = pneg %p61
      %p220 = pneg %p85
      %p221 = pneg %p82
      %p222 = pneg %p106
      %p223 = pneg %p103
      %p224 = pneg %p132
      %p225 = pneg %p129
      %p226 = scmp.lt.s32.totalorder %s17, 1
      %s227 = scalar_select %p226, %s17, 1
      %s228 = smul.addr %s227, 8
      %s229 = smul.addr %s228, 8
      %s230 = scalar_lea.vmem %s4, %s229
      %p231 = pneg %p158
      %p232 = pneg %p155
      %p233 = scmp.lt.s32.totalorder %s17, 1
      %s234 = scalar_select %p233, %s17, 1
      %s235 = smul.addr %s234, 8
      %s236 = smul.addr %s235, 8
      %s237 = scalar_lea.vmem %s5, %s236
      %p238 = scmp.lt.s32.totalorder %s17, 1
      %s239 = scalar_select %p238, %s17, 1
      %s240 = smul.addr %s239, 82
      %s241 = smul.addr %s240, 4
      %s242 = scalar_lea.vmem %s0, %s241
      %p243 = scmp.lt.s32.totalorder %s17, 1
      %s244 = scalar_select %p243, %s17, 1
      %s245 = smul.addr %s244, 8
      %s246 = smul.addr %s245, 8
      %s247 = scalar_lea.vmem %s1, %s246
      %p248 = scmp.lt.s32.totalorder %s17, 1
      %s249 = scalar_select %p248, %s17, 1
      %s250 = smul.addr %s249, 8
      %s251 = smul.addr %s250, 8
      %s252 = scalar_lea.vmem %s4, %s251
      %p253 = scmp.lt.s32.totalorder %s17, 1
      %s254 = scalar_select %p253, %s17, 1
      %s255 = smul.addr %s254, 8
      %s256 = smul.addr %s255, 8
      %s257 = scalar_lea.vmem %s5, %s256
      %v259 = vld [vmem:[%s2] sm:$0xff]
      %v260 = vld [vmem:[%s2 + $0x8] sm:$0xf]
      %v261 = vld [vmem:[%s2 + $0xc] sm:$0xff]
      %v262 = vld [vmem:[%s2 + $0x14] sm:$0xf]
      %v263 = vld [vmem:[%s2 + $0x18] sm:$0xff]
      %v264 = vld [vmem:[%s2 + $0x20] sm:$0xf]
      %v265 = vld [vmem:[%s2 + $0x24] sm:$0xff]
      %v266 = vld [vmem:[%s2 + $0x2c] sm:$0xf]
      %v267 = vld [vmem:[%s2 + $0x30] sm:$0xff]
      %v268 = vld [vmem:[%s2 + $0x38] sm:$0xf]
      %v269 = vld [vmem:[%s2 + $0x3c] sm:$0xff]
      %v270 = vld [vmem:[%s2 + $0x44] sm:$0xf]
      %v271 = vld [vmem:[%s2 + $0x48] sm:$0xff]
      %v272 = vld [vmem:[%s2 + $0x50] sm:$0xf]
      %v273 = vld [vmem:[%s2 + $0x54] sm:$0xff]
      %v274 = vld [vmem:[%s2 + $0x5c] sm:$0xf]
      %v275 = vld [vmem:[%s2 + $0x60] sm:$0xff]
      %v276 = vld [vmem:[%s2 + $0x68] sm:$0xf]
      %v277 = vld [vmem:[%s2 + $0x6c] sm:$0xff]
      %v278 = vld [vmem:[%s2 + $0x74] sm:$0xf]
      %v279 = vld [vmem:[%s2 + $0x78] sm:$0xff]
      %v280 = vld [vmem:[%s2 + $0x80] sm:$0xf]
      %v281 = vld [vmem:[%s2 + $0x84] sm:$0xff]
      %v282 = vld [vmem:[%s2 + $0x8c] sm:$0xf]
      %v283 = vld [vmem:[%s2 + $0x90] sm:$0xff]
      %v284 = vld [vmem:[%s2 + $0x98] sm:$0xf]
      %v285 = vld [vmem:[%s2 + $0x9c] sm:$0xff]
      %v286 = vld [vmem:[%s2 + $0xa4] sm:$0xf]
      %v287 = vld [vmem:[%s2 + $0xa8] sm:$0xff]
      %v288 = vld [vmem:[%s2 + $0xb0] sm:$0xf]
      %v289 = vld [vmem:[%s2 + $0xb4] sm:$0xff]
      %v290 = vld [vmem:[%s2 + $0xbc] sm:$0xf]
      %v291 = vld [vmem:[%s242] sm:$0xff]
      %v292 = vld [vmem:[%s242 + $0x8] sm:$0xff]
      %v293 = vld [vmem:[%s242 + $0x10] sm:$0xff]
      %v294 = vld [vmem:[%s242 + $0x18] sm:$0xff]
      %v295 = vld [vmem:[%s242 + $0x20] sm:$0xff]
      %v296 = vld [vmem:[%s242 + $0x28] sm:$0xff]
      %v297 = vld [vmem:[%s242 + $0x30] sm:$0xff]
      %v298 = vld [vmem:[%s242 + $0x38] sm:$0xff]
      %v299 = vld [vmem:[%s242 + $0x40] sm:$0xff]
      %v300 = vld [vmem:[%s242 + $0x48] sm:$0xff]
      %v301 = vld [vmem:[%s242 + $0x50] sm:$0xff]
      %v302 = vld [vmem:[%s242 + $0x58] sm:$0xff]
      %v303 = vld [vmem:[%s242 + $0x60] sm:$0xff]
      %v304 = vld [vmem:[%s242 + $0x68] sm:$0xff]
      %v305 = vld [vmem:[%s242 + $0x70] sm:$0xff]
      %v306 = vld [vmem:[%s242 + $0x78] sm:$0xff]
      %v307 = vld [vmem:[%s242 + $0x80] sm:$0xff]
      %v308 = vld [vmem:[%s242 + $0x88] sm:$0xff]
      %v309 = vld [vmem:[%s242 + $0x90] sm:$0xff]
      %v310 = vld [vmem:[%s242 + $0x98] sm:$0xff]
      %v311 = vld [vmem:[%s242 + $0xa0] sm:$0xff]
      %v312 = vld [vmem:[%s242 + $0xa8] sm:$0xff]
      %v313 = vld [vmem:[%s242 + $0xb0] sm:$0xff]
      %v314 = vld [vmem:[%s242 + $0xb8] sm:$0xff]
      %v315 = vld [vmem:[%s242 + $0xc0] sm:$0xff]
      %v316 = vld [vmem:[%s242 + $0xc8] sm:$0xff]
      %v317 = vld [vmem:[%s242 + $0xd0] sm:$0xff]
      %v318 = vld [vmem:[%s242 + $0xd8] sm:$0xff]
      %v319 = vld [vmem:[%s242 + $0xe0] sm:$0xff]
      %v320 = vld [vmem:[%s242 + $0xe8] sm:$0xff]
      %v321 = vld [vmem:[%s242 + $0xf0] sm:$0xff]
      %v322 = vld [vmem:[%s242 + $0xf8] sm:$0xff]
      %v323 = vld [vmem:[%s242 + $0x100] sm:$0xff]
      %v324 = vld [vmem:[%s242 + $0x108] sm:$0xff]
      %v325 = vld [vmem:[%s242 + $0x110] sm:$0xff]
      %v326 = vld [vmem:[%s242 + $0x118] sm:$0xff]
      %v327 = vld [vmem:[%s242 + $0x120] sm:$0xff]
      %v328 = vld [vmem:[%s242 + $0x128] sm:$0xff]
      %v329 = vld [vmem:[%s242 + $0x130] sm:$0xff]
      %v330 = vld [vmem:[%s242 + $0x138] sm:$0xff]
      %v331 = vld [vmem:[%s242 + $0x140] sm:$0x33]
      %v332 = vld [vmem:[%s3] sm:$0xff]
      %v333 = vld [vmem:[%s3 + $0x8] sm:$0xff]
      %v334 = vld [vmem:[%s3 + $0x10] sm:$0xff]
      %v335 = vld [vmem:[%s3 + $0x18] sm:$0xff]
      %v336 = vld [vmem:[%s3 + $0x20] sm:$0xff]
      %v337 = vld [vmem:[%s3 + $0x28] sm:$0xff]
      %v338 = vld [vmem:[%s3 + $0x30] sm:$0xff]
      %v339 = vld [vmem:[%s3 + $0x38] sm:$0xff]
      %v340 = vld [vmem:[%s3 + $0x40] sm:$0xff]
      %v341 = vld [vmem:[%s3 + $0x48] sm:$0xff]
      %v342 = vld [vmem:[%s3 + $0x50] sm:$0xff]
      %v343 = vld [vmem:[%s3 + $0x58] sm:$0xff]
      %v344 = vld [vmem:[%s3 + $0x60] sm:$0xff]
      %v345 = vld [vmem:[%s3 + $0x68] sm:$0xff]
      %v346 = vld [vmem:[%s3 + $0x70] sm:$0xff]
      %v347 = vld [vmem:[%s3 + $0x78] sm:$0xff]
      %349 = vset.pattern.permute.xlu0 0
      %350 = vperm.xlu0 %349, %v332
      %v351 = vpop.permute.xlu0 %350
      %354 = vset.pattern.permute.xlu0 0
      %355 = vperm.xlu0 %354, %v333
      %v356 = vpop.permute.xlu0 %355
      %359 = vset.pattern.permute.xlu0 0
      %360 = vperm.xlu0 %359, %v334
      %v361 = vpop.permute.xlu0 %360
      %364 = vset.pattern.permute.xlu0 0
      %365 = vperm.xlu0 %364, %v335
      %v366 = vpop.permute.xlu0 %365
      %369 = vset.pattern.permute.xlu0 0
      %370 = vperm.xlu0 %369, %v336
      %v371 = vpop.permute.xlu0 %370
      %374 = vset.pattern.permute.xlu0 0
      %375 = vperm.xlu0 %374, %v337
      %v376 = vpop.permute.xlu0 %375
      %379 = vset.pattern.permute.xlu0 0
      %380 = vperm.xlu0 %379, %v338
      %v381 = vpop.permute.xlu0 %380
      %384 = vset.pattern.permute.xlu0 0
      %385 = vperm.xlu0 %384, %v339
      %v386 = vpop.permute.xlu0 %385
      %389 = vset.pattern.permute.xlu0 0
      %390 = vperm.xlu0 %389, %v340
      %v391 = vpop.permute.xlu0 %390
      %394 = vset.pattern.permute.xlu0 0
      %395 = vperm.xlu0 %394, %v341
      %v396 = vpop.permute.xlu0 %395
      %399 = vset.pattern.permute.xlu0 0
      %400 = vperm.xlu0 %399, %v342
      %v401 = vpop.permute.xlu0 %400
      %404 = vset.pattern.permute.xlu0 0
      %405 = vperm.xlu0 %404, %v343
      %v406 = vpop.permute.xlu0 %405
      %409 = vset.pattern.permute.xlu0 0
      %410 = vperm.xlu0 %409, %v344
      %v411 = vpop.permute.xlu0 %410
      %414 = vset.pattern.permute.xlu0 0
      %415 = vperm.xlu0 %414, %v345
      %v416 = vpop.permute.xlu0 %415
      %419 = vset.pattern.permute.xlu0 0
      %420 = vperm.xlu0 %419, %v346
      %v421 = vpop.permute.xlu0 %420
      %424 = vset.pattern.permute.xlu0 0
      %425 = vperm.xlu0 %424, %v347
      %v426 = vpop.permute.xlu0 %425
      %v460 = vunpack.c.l.b16 %v259
      %v461 = vunpack.c.h.b16 %v259
      %v462 = vunpack.c.l.b16 %v260
      %v463 = vunpack.c.l.b16 %v261
      %v464 = vunpack.c.h.b16 %v261
      %v465 = vunpack.c.l.b16 %v262
      %v466 = vunpack.c.l.b16 %v263
      %v467 = vunpack.c.h.b16 %v263
      %v468 = vunpack.c.l.b16 %v264
      %v469 = vunpack.c.l.b16 %v265
      %v470 = vunpack.c.h.b16 %v265
      %v471 = vunpack.c.l.b16 %v266
      %v472 = vunpack.c.l.b16 %v267
      %v473 = vunpack.c.h.b16 %v267
      %v474 = vunpack.c.l.b16 %v268
      %v475 = vunpack.c.l.b16 %v269
      %v476 = vunpack.c.h.b16 %v269
      %v477 = vunpack.c.l.b16 %v270
      %v478 = vunpack.c.l.b16 %v271
      %v479 = vunpack.c.h.b16 %v271
      %v480 = vunpack.c.l.b16 %v272
      %v481 = vunpack.c.l.b16 %v273
      %v482 = vunpack.c.h.b16 %v273
      %v483 = vunpack.c.l.b16 %v274
      %v484 = vunpack.c.l.b16 %v275
      %v485 = vunpack.c.h.b16 %v275
      %v486 = vunpack.c.l.b16 %v276
      %v487 = vunpack.c.l.b16 %v277
      %v488 = vunpack.c.h.b16 %v277
      %v489 = vunpack.c.l.b16 %v278
      %v490 = vunpack.c.l.b16 %v279
      %v491 = vunpack.c.h.b16 %v279
      %v492 = vunpack.c.l.b16 %v280
      %v493 = vunpack.c.l.b16 %v281
      %v494 = vunpack.c.h.b16 %v281
      %v495 = vunpack.c.l.b16 %v282
      %v496 = vunpack.c.l.b16 %v283
      %v497 = vunpack.c.h.b16 %v283
      %v498 = vunpack.c.l.b16 %v284
      %v499 = vunpack.c.l.b16 %v285
      %v500 = vunpack.c.h.b16 %v285
      %v501 = vunpack.c.l.b16 %v286
      %v502 = vunpack.c.l.b16 %v287
      %v503 = vunpack.c.h.b16 %v287
      %v504 = vunpack.c.l.b16 %v288
      %v505 = vunpack.c.l.b16 %v289
      %v506 = vunpack.c.h.b16 %v289
      %v507 = vunpack.c.l.b16 %v290
      %v508 = vpack.c.b16 %v463, %v460
      %v509 = vpack.c.b16 %v464, %v461
      %v510 = vpack.c.b16 %v465, %v462
      %v511 = vpack.c.b16 %v469, %v466
      %v512 = vpack.c.b16 %v470, %v467
      %v513 = vpack.c.b16 %v471, %v468
      %v514 = vpack.c.b16 %v475, %v472
      %v515 = vpack.c.b16 %v476, %v473
      %v516 = vpack.c.b16 %v477, %v474
      %v517 = vpack.c.b16 %v481, %v478
      %v518 = vpack.c.b16 %v482, %v479
      %v519 = vpack.c.b16 %v483, %v480
      %v520 = vpack.c.b16 %v487, %v484
      %v521 = vpack.c.b16 %v488, %v485
      %v522 = vpack.c.b16 %v489, %v486
      %v523 = vpack.c.b16 %v493, %v490
      %v524 = vpack.c.b16 %v494, %v491
      %v525 = vpack.c.b16 %v495, %v492
      %v526 = vpack.c.b16 %v499, %v496
      %v527 = vpack.c.b16 %v500, %v497
      %v528 = vpack.c.b16 %v501, %v498
      %v529 = vpack.c.b16 %v505, %v502
      %v530 = vpack.c.b16 %v506, %v503
      %v531 = vpack.c.b16 %v507, %v504
      %v589 = vunpack.c.l.b16 %v291
      %v590 = vunpack.c.h.b16 %v291
      %v591 = vunpack.c.l.b16 %v292
      %v592 = vunpack.c.h.b16 %v292
      %v593 = vunpack.c.l.b16 %v293
      %v594 = vunpack.c.h.b16 %v293
      %v595 = vunpack.c.l.b16 %v294
      %v596 = vunpack.c.h.b16 %v294
      %v597 = vunpack.c.l.b16 %v295
      %v598 = vunpack.c.h.b16 %v295
      %v599 = vunpack.c.l.b16 %v296
      %v600 = vunpack.c.h.b16 %v296
      %v601 = vunpack.c.l.b16 %v297
      %v602 = vunpack.c.h.b16 %v297
      %v603 = vunpack.c.l.b16 %v298
      %v604 = vunpack.c.h.b16 %v298
      %v605 = vunpack.c.l.b16 %v299
      %v606 = vunpack.c.h.b16 %v299
      %v607 = vunpack.c.l.b16 %v300
      %v608 = vunpack.c.h.b16 %v300
      %v609 = vunpack.c.l.b16 %v301
      %v610 = vunpack.c.h.b16 %v301
      %v611 = vunpack.c.l.b16 %v302
      %v612 = vunpack.c.h.b16 %v302
      %v613 = vunpack.c.l.b16 %v303
      %v614 = vunpack.c.h.b16 %v303
      %v615 = vunpack.c.l.b16 %v304
      %v616 = vunpack.c.h.b16 %v304
      %v617 = vunpack.c.l.b16 %v305
      %v618 = vunpack.c.h.b16 %v305
      %v619 = vunpack.c.l.b16 %v306
      %v620 = vunpack.c.h.b16 %v306
      %v621 = vunpack.c.l.b16 %v307
      %v622 = vunpack.c.h.b16 %v307
      %v623 = vunpack.c.l.b16 %v308
      %v624 = vunpack.c.h.b16 %v308
      %v625 = vunpack.c.l.b16 %v309
      %v626 = vunpack.c.h.b16 %v309
      %v627 = vunpack.c.l.b16 %v310
      %v628 = vunpack.c.h.b16 %v310
      %v629 = vunpack.c.l.b16 %v311
      %v630 = vunpack.c.h.b16 %v311
      %v631 = vunpack.c.l.b16 %v312
      %v632 = vunpack.c.h.b16 %v312
      %v633 = vunpack.c.l.b16 %v313
      %v634 = vunpack.c.h.b16 %v313
      %v635 = vunpack.c.l.b16 %v314
      %v636 = vunpack.c.h.b16 %v314
      %v637 = vunpack.c.l.b16 %v315
      %v638 = vunpack.c.h.b16 %v315
      %v639 = vunpack.c.l.b16 %v316
      %v640 = vunpack.c.h.b16 %v316
      %v641 = vunpack.c.l.b16 %v317
      %v642 = vunpack.c.h.b16 %v317
      %v643 = vunpack.c.l.b16 %v318
      %v644 = vunpack.c.h.b16 %v318
      %v645 = vunpack.c.l.b16 %v319
      %v646 = vunpack.c.h.b16 %v319
      %v647 = vunpack.c.l.b16 %v320
      %v648 = vunpack.c.h.b16 %v320
      %v649 = vunpack.c.l.b16 %v321
      %v650 = vunpack.c.h.b16 %v321
      %v651 = vunpack.c.l.b16 %v322
      %v652 = vunpack.c.h.b16 %v322
      %v653 = vunpack.c.l.b16 %v323
      %v654 = vunpack.c.h.b16 %v323
      %v655 = vunpack.c.l.b16 %v324
      %v656 = vunpack.c.h.b16 %v324
      %v657 = vunpack.c.l.b16 %v325
      %v658 = vunpack.c.h.b16 %v325
      %v659 = vunpack.c.l.b16 %v326
      %v660 = vunpack.c.h.b16 %v326
      %v661 = vunpack.c.l.b16 %v327
      %v662 = vunpack.c.h.b16 %v327
      %v663 = vunpack.c.l.b16 %v328
      %v664 = vunpack.c.h.b16 %v328
      %v665 = vunpack.c.l.b16 %v329
      %v666 = vunpack.c.h.b16 %v329
      %v667 = vunpack.c.l.b16 %v330
      %v668 = vunpack.c.h.b16 %v330
      %v669 = vunpack.c.l.b16 %v331
      %v670 = vunpack.c.h.b16 %v331
      %v671 = vpack.c.b16 %v591, %v589
      %v672 = vpack.c.b16 %v592, %v590
      %v673 = vpack.c.b16 %v595, %v593
      %v674 = vpack.c.b16 %v596, %v594
      %v675 = vpack.c.b16 %v599, %v597
      %v676 = vpack.c.b16 %v600, %v598
      %v677 = vpack.c.b16 %v603, %v601
      %v678 = vpack.c.b16 %v604, %v602
      %v679 = vpack.c.b16 %v607, %v605
      %v680 = vpack.c.b16 %v608, %v606
      %v681 = vpack.c.b16 %v611, %v609
      %v682 = vpack.c.b16 %v612, %v610
      %v683 = vpack.c.b16 %v615, %v613
      %v684 = vpack.c.b16 %v616, %v614
      %v685 = vpack.c.b16 %v619, %v617
      %v686 = vpack.c.b16 %v620, %v618
      %v687 = vpack.c.b16 %v623, %v621
      %v688 = vpack.c.b16 %v624, %v622
      %v689 = vpack.c.b16 %v627, %v625
      %v690 = vpack.c.b16 %v628, %v626
      %v691 = vpack.c.b16 %v631, %v629
      %v692 = vpack.c.b16 %v632, %v630
      %v693 = vpack.c.b16 %v635, %v633
      %v694 = vpack.c.b16 %v636, %v634
      %v695 = vpack.c.b16 %v639, %v637
      %v696 = vpack.c.b16 %v640, %v638
      %v697 = vpack.c.b16 %v643, %v641
      %v698 = vpack.c.b16 %v644, %v642
      %v699 = vpack.c.b16 %v647, %v645
      %v700 = vpack.c.b16 %v648, %v646
      %v701 = vpack.c.b16 %v651, %v649
      %v702 = vpack.c.b16 %v652, %v650
      %v703 = vpack.c.b16 %v655, %v653
      %v704 = vpack.c.b16 %v656, %v654
      %v705 = vpack.c.b16 %v659, %v657
      %v706 = vpack.c.b16 %v660, %v658
      %v707 = vpack.c.b16 %v663, %v661
      %v708 = vpack.c.b16 %v664, %v662
      %v709 = vpack.c.b16 %v667, %v665
      %v710 = vpack.c.b16 %v668, %v666
      %v711 = vpack.c.b16 %v669, %v669
      %v712 = vpack.c.b16 %v670, %v670
      %vm753 = vcmask 556032
      %v755 = vsel %vm753, %v510, 0
      %v758 = vsel %vm753, %v513, 0
      %v761 = vsel %vm753, %v516, 0
      %v764 = vsel %vm753, %v519, 0
      %v767 = vsel %vm753, %v522, 0
      %v770 = vsel %vm753, %v525, 0
      %v773 = vsel %vm753, %v528, 0
      %v776 = vsel %vm753, %v531, 0
      %vm778 = vcmask 1041408
      %v780 = vsel %vm778, %v711, 0
      %v783 = vsel %vm778, %v712, 0
      %785 = vmatprep.subr.bf16.mxu0 %v672
      %786 = vmatpush1.bf16.msra.mxu0 %v671
      %787 = vmatprep.subr.bf16.mxu0 %v674
      %788 = vmatpush1.bf16.msra.mxu0 %v673
      %789 = vmatprep.subr.bf16.mxu0 %v676
      %790 = vmatpush1.bf16.msra.mxu0 %v675
      %791 = vmatprep.subr.bf16.mxu0 %v678
      %792 = vmatpush1.bf16.msra.mxu0 %v677
      %793 = vmatprep.subr.bf16.mxu0 %v680
      %794 = vmatpush1.bf16.msra.mxu0 %v679
      %795 = vmatprep.subr.bf16.mxu0 %v682
      %796 = vmatpush1.bf16.msra.mxu0 %v681
      %797 = vmatprep.subr.bf16.mxu0 %v684
      %798 = vmatpush1.bf16.msra.mxu0 %v683
      %799 = vmatprep.subr.bf16.mxu0 %v686
      %800 = vmatpush1.bf16.msra.mxu0 %v685
      %801 = vmatprep.subr.bf16.mxu0 %v688
      %802 = vmatpush1.bf16.msra.mxu0 %v687
      %803 = vmatprep.subr.bf16.mxu0 %v690
      %804 = vmatpush1.bf16.msra.mxu0 %v689
      %805 = vmatprep.subr.bf16.mxu0 %v692
      %806 = vmatpush1.bf16.msra.mxu0 %v691
      %807 = vmatprep.subr.bf16.mxu0 %v694
      %808 = vmatpush1.bf16.msra.mxu0 %v693
      %809 = vmatprep.subr.bf16.mxu0 %v696
      %810 = vmatpush1.bf16.msra.mxu0 %v695
      %811 = vmatprep.subr.bf16.mxu0 %v698
      %812 = vmatpush1.bf16.msra.mxu0 %v697
      %813 = vmatprep.subr.bf16.mxu0 %v700
      %814 = vmatpush1.bf16.msra.mxu0 %v699
      %815 = vmatprep.subr.bf16.mxu0 %v702
      %816 = vmatpush1.bf16.msra.mxu0 %v701
      %817 = vmatprep.mubr.bf16.mxu0 %v509
      %818 = vmatmul.mubr.bf16.gmra.mrb[0].mxu0 %v508
      %v819 = vpop.f32.mrb[0].mxu0
      %v820 = vadd.f32 %v351, %v819
      %v821 = vpop.f32.mrb[0].mxu0
      %v822 = vadd.f32 %v351, %v821
      %v823 = vpop.f32.mrb[0].mxu0
      %v824 = vadd.f32 %v356, %v823
      %v825 = vpop.f32.mrb[0].mxu0
      %v826 = vadd.f32 %v356, %v825
      %827 = vmatprep.mubr.bf16.mxu0 %v512
      %828 = vmatmul.mubr.bf16.gmra.mrb[0].mxu0 %v511
      %v829 = vpop.f32.mrb[0].mxu0
      %v830 = vadd.f32 %v361, %v829
      %v831 = vpop.f32.mrb[0].mxu0
      %v832 = vadd.f32 %v361, %v831
      %v833 = vpop.f32.mrb[0].mxu0
      %v834 = vadd.f32 %v366, %v833
      %v835 = vpop.f32.mrb[0].mxu0
      %v836 = vadd.f32 %v366, %v835
      %837 = vmatprep.mubr.bf16.mxu0 %v515
      %838 = vmatmul.mubr.bf16.gmra.mrb[0].mxu0 %v514
      %v839 = vpop.f32.mrb[0].mxu0
      %v840 = vadd.f32 %v371, %v839
      %v841 = vpop.f32.mrb[0].mxu0
      %v842 = vadd.f32 %v371, %v841
      %v843 = vpop.f32.mrb[0].mxu0
      %v844 = vadd.f32 %v376, %v843
      %v845 = vpop.f32.mrb[0].mxu0
      %v846 = vadd.f32 %v376, %v845
      %847 = vmatprep.mubr.bf16.mxu0 %v518
      %848 = vmatmul.mubr.bf16.gmra.mrb[0].mxu0 %v517
      %v849 = vpop.f32.mrb[0].mxu0
      %v850 = vadd.f32 %v381, %v849
      %v851 = vpop.f32.mrb[0].mxu0
      %v852 = vadd.f32 %v381, %v851
      %v853 = vpop.f32.mrb[0].mxu0
      %v854 = vadd.f32 %v386, %v853
      %v855 = vpop.f32.mrb[0].mxu0
      %v856 = vadd.f32 %v386, %v855
      %857 = vmatprep.mubr.bf16.mxu0 %v521
      %858 = vmatmul.mubr.bf16.gmra.mrb[0].mxu0 %v520
      %v859 = vpop.f32.mrb[0].mxu0
      %v860 = vadd.f32 %v391, %v859
      %v861 = vpop.f32.mrb[0].mxu0
      %v862 = vadd.f32 %v391, %v861
      %v863 = vpop.f32.mrb[0].mxu0
      %v864 = vadd.f32 %v396, %v863
      %v865 = vpop.f32.mrb[0].mxu0
      %v866 = vadd.f32 %v396, %v865
      %867 = vmatprep.mubr.bf16.mxu0 %v524
      %868 = vmatmul.mubr.bf16.gmra.mrb[0].mxu0 %v523
      %v869 = vpop.f32.mrb[0].mxu0
      %v870 = vadd.f32 %v401, %v869
      %v871 = vpop.f32.mrb[0].mxu0
      %v872 = vadd.f32 %v401, %v871
      %v873 = vpop.f32.mrb[0].mxu0
      %v874 = vadd.f32 %v406, %v873
      %v875 = vpop.f32.mrb[0].mxu0
      %v876 = vadd.f32 %v406, %v875
      %877 = vmatprep.mubr.bf16.mxu0 %v527
      %878 = vmatmul.mubr.bf16.gmra.mrb[0].mxu0 %v526
      %v879 = vpop.f32.mrb[0].mxu0
      %v880 = vadd.f32 %v411, %v879
      %v881 = vpop.f32.mrb[0].mxu0
      %v882 = vadd.f32 %v411, %v881
      %v883 = vpop.f32.mrb[0].mxu0
      %v884 = vadd.f32 %v416, %v883
      %v885 = vpop.f32.mrb[0].mxu0
      %v886 = vadd.f32 %v416, %v885
      %887 = vmatprep.mubr.bf16.mxu0 %v530
      %888 = vmatmul.mubr.bf16.gmra.mrb[0].mxu0 %v529
      %v889 = vpop.f32.mrb[0].mxu0
      %v890 = vadd.f32 %v421, %v889
      %v891 = vpop.f32.mrb[0].mxu0
      %v892 = vadd.f32 %v421, %v891
      %v893 = vpop.f32.mrb[0].mxu0
      %v894 = vadd.f32 %v426, %v893
      %v895 = vpop.f32.mrb[0].mxu0
      %v896 = vadd.f32 %v426, %v895
      %897 = vdwg.mxu0
      %898 = vmatprep.subr.bf16.mxu0 %v704
      %899 = vmatpush1.bf16.msra.mxu0 %v703
      %900 = vmatprep.subr.bf16.mxu0 %v706
      %901 = vmatpush1.bf16.msra.mxu0 %v705
      %902 = vmatprep.subr.bf16.mxu0 %v708
      %903 = vmatpush1.bf16.msra.mxu0 %v707
      %904 = vmatprep.subr.bf16.mxu0 %v710
      %905 = vmatpush1.bf16.msra.mxu0 %v709
      %906 = vmatprep.subr.bf16.mxu0 %v783
      %907 = vmatpush1.bf16.msra.mxu0 %v780
      %908 = vmatprep.subr.bf16.mxu0 0
      %909 = vmatpush1.bf16.msra.mxu0 0
      %910 = vmatprep.subr.bf16.mxu0 0
      %911 = vmatpush1.bf16.msra.mxu0 0
      %912 = vmatprep.subr.bf16.mxu0 0
      %913 = vmatpush1.bf16.msra.mxu0 0
      %914 = vmatprep.subr.bf16.mxu0 0
      %915 = vmatpush1.bf16.msra.mxu0 0
      %916 = vmatprep.subr.bf16.mxu0 0
      %917 = vmatpush1.bf16.msra.mxu0 0
      %918 = vmatprep.subr.bf16.mxu0 0
      %919 = vmatpush1.bf16.msra.mxu0 0
      %920 = vmatprep.subr.bf16.mxu0 0
      %921 = vmatpush1.bf16.msra.mxu0 0
      %922 = vmatprep.subr.bf16.mxu0 0
      %923 = vmatpush1.bf16.msra.mxu0 0
      %924 = vmatprep.subr.bf16.mxu0 0
      %925 = vmatpush1.bf16.msra.mxu0 0
      %926 = vmatprep.subr.bf16.mxu0 0
      %927 = vmatpush1.bf16.msra.mxu0 0
      %928 = vmatprep.subr.bf16.mxu0 0
      %929 = vmatpush1.bf16.msra.mxu0 0
      %930 = vmatprep.mubr.bf16.mxu0 0
      %931 = vmatmul.mubr.bf16.gmra.mrb[0].mxu0 %v755
      %v932 = vpop.f32.mrb[0].mxu0
      %v933 = vadd.f32 %v820, %v932
      %v934 = vpop.f32.mrb[0].mxu0
      %v935 = vadd.f32 %v822, %v934
      %v936 = vpop.f32.mrb[0].mxu0
      %v937 = vadd.f32 %v824, %v936
      %v938 = vpop.f32.mrb[0].mxu0
      %v939 = vadd.f32 %v826, %v938
      %940 = vmatprep.mubr.bf16.mxu0 0
      %941 = vmatmul.mubr.bf16.gmra.mrb[0].mxu0 %v758
      %v942 = vpop.f32.mrb[0].mxu0
      %v943 = vadd.f32 %v830, %v942
      %v944 = vpop.f32.mrb[0].mxu0
      %v945 = vadd.f32 %v832, %v944
      %v946 = vpop.f32.mrb[0].mxu0
      %v947 = vadd.f32 %v834, %v946
      %v948 = vpop.f32.mrb[0].mxu0
      %v949 = vadd.f32 %v836, %v948
      %950 = vmatprep.mubr.bf16.mxu0 0
      %951 = vmatmul.mubr.bf16.gmra.mrb[0].mxu0 %v761
      %v952 = vpop.f32.mrb[0].mxu0
      %v953 = vadd.f32 %v840, %v952
      %v954 = vpop.f32.mrb[0].mxu0
      %v955 = vadd.f32 %v842, %v954
      %v956 = vpop.f32.mrb[0].mxu0
      %v957 = vadd.f32 %v844, %v956
      %v958 = vpop.f32.mrb[0].mxu0
      %v959 = vadd.f32 %v846, %v958
      %960 = vmatprep.mubr.bf16.mxu0 0
      %961 = vmatmul.mubr.bf16.gmra.mrb[0].mxu0 %v764
      %v962 = vpop.f32.mrb[0].mxu0
      %v963 = vadd.f32 %v850, %v962
      %v964 = vpop.f32.mrb[0].mxu0
      %v965 = vadd.f32 %v852, %v964
      %v966 = vpop.f32.mrb[0].mxu0
      %v967 = vadd.f32 %v854, %v966
      %v968 = vpop.f32.mrb[0].mxu0
      %v969 = vadd.f32 %v856, %v968
      %970 = vmatprep.mubr.bf16.mxu0 0
      %971 = vmatmul.mubr.bf16.gmra.mrb[0].mxu0 %v767
      %v972 = vpop.f32.mrb[0].mxu0
      %v973 = vadd.f32 %v860, %v972
      %v974 = vpop.f32.mrb[0].mxu0
      %v975 = vadd.f32 %v862, %v974
      %v976 = vpop.f32.mrb[0].mxu0
      %v977 = vadd.f32 %v864, %v976
      %v978 = vpop.f32.mrb[0].mxu0
      %v979 = vadd.f32 %v866, %v978
      %980 = vmatprep.mubr.bf16.mxu0 0
      %981 = vmatmul.mubr.bf16.gmra.mrb[0].mxu0 %v770
      %v982 = vpop.f32.mrb[0].mxu0
      %v983 = vadd.f32 %v870, %v982
      %v984 = vpop.f32.mrb[0].mxu0
      %v985 = vadd.f32 %v872, %v984
      %v986 = vpop.f32.mrb[0].mxu0
      %v987 = vadd.f32 %v874, %v986
      %v988 = vpop.f32.mrb[0].mxu0
      %v989 = vadd.f32 %v876, %v988
      %990 = vmatprep.mubr.bf16.mxu0 0
      %991 = vmatmul.mubr.bf16.gmra.mrb[0].mxu0 %v773
      %v992 = vpop.f32.mrb[0].mxu0
      %v993 = vadd.f32 %v880, %v992
      %v994 = vpop.f32.mrb[0].mxu0
      %v995 = vadd.f32 %v882, %v994
      %v996 = vpop.f32.mrb[0].mxu0
      %v997 = vadd.f32 %v884, %v996
      %v998 = vpop.f32.mrb[0].mxu0
      %v999 = vadd.f32 %v886, %v998
      %1000 = vmatprep.mubr.bf16.mxu0 0
      %1001 = vmatmul.mubr.bf16.gmra.mrb[0].mxu0 %v776
      %v1002 = vpop.f32.mrb[0].mxu0
      %v1003 = vadd.f32 %v890, %v1002
      %v1004 = vpop.f32.mrb[0].mxu0
      %v1005 = vadd.f32 %v892, %v1004
      %v1006 = vpop.f32.mrb[0].mxu0
      %v1007 = vadd.f32 %v894, %v1006
      %v1008 = vpop.f32.mrb[0].mxu0
      %v1009 = vadd.f32 %v896, %v1008
      %1010 = vdwg.mxu0
      %1011 = vst [vmem:[#allocation2] sm:$0xff] %v933
      %1012 = vst [vmem:[#allocation2 + $0x8] sm:$0xff] %v935
      %1013 = vst [vmem:[#allocation2 + $0x10] sm:$0xff] %v937
      %1014 = vst [vmem:[#allocation2 + $0x18] sm:$0xff] %v939
      %1015 = vst [vmem:[#allocation2 + $0x20] sm:$0xff] %v943
      %1016 = vst [vmem:[#allocation2 + $0x28] sm:$0xff] %v945
      %1017 = vst [vmem:[#allocation2 + $0x30] sm:$0xff] %v947
      %1018 = vst [vmem:[#allocation2 + $0x38] sm:$0xff] %v949
      %1019 = vst [vmem:[#allocation2 + $0x40] sm:$0xff] %v953
      %1020 = vst [vmem:[#allocation2 + $0x48] sm:$0xff] %v955
      %1021 = vst [vmem:[#allocation2 + $0x50] sm:$0xff] %v957
      %1022 = vst [vmem:[#allocation2 + $0x58] sm:$0xff] %v959
      %1023 = vst [vmem:[#allocation2 + $0x60] sm:$0xff] %v963
      %1024 = vst [vmem:[#allocation2 + $0x68] sm:$0xff] %v965
      %1025 = vst [vmem:[#allocation2 + $0x70] sm:$0xff] %v967
      %1026 = vst [vmem:[#allocation2 + $0x78] sm:$0xff] %v969
      %1027 = vst [vmem:[#allocation2 + $0x80] sm:$0xff] %v973
      %1028 = vst [vmem:[#allocation2 + $0x88] sm:$0xff] %v975
      %1029 = vst [vmem:[#allocation2 + $0x90] sm:$0xff] %v977
      %1030 = vst [vmem:[#allocation2 + $0x98] sm:$0xff] %v979
      %1031 = vst [vmem:[#allocation2 + $0xa0] sm:$0xff] %v983
      %1032 = vst [vmem:[#allocation2 + $0xa8] sm:$0xff] %v985
      %1033 = vst [vmem:[#allocation2 + $0xb0] sm:$0xff] %v987
      %1034 = vst [vmem:[#allocation2 + $0xb8] sm:$0xff] %v989
      %1035 = vst [vmem:[#allocation2 + $0xc0] sm:$0xff] %v993
      %1036 = vst [vmem:[#allocation2 + $0xc8] sm:$0xff] %v995
      %1037 = vst [vmem:[#allocation2 + $0xd0] sm:$0xff] %v997
      %1038 = vst [vmem:[#allocation2 + $0xd8] sm:$0xff] %v999
      %1039 = vst [vmem:[#allocation2 + $0xe0] sm:$0xff] %v1003
      %1040 = vst [vmem:[#allocation2 + $0xe8] sm:$0xff] %v1005
      %1041 = vst [vmem:[#allocation2 + $0xf0] sm:$0xff] %v1007
      %1042 = vst [vmem:[#allocation2 + $0xf8] sm:$0xff] %v1009
      %v1043 = vld [vmem:[%s247] sm:$0xff]
      %v1044 = vld [vmem:[%s247 + $0x8] sm:$0xff]
      %v1045 = vld [vmem:[%s247 + $0x10] sm:$0xff]
      %v1046 = vld [vmem:[%s247 + $0x18] sm:$0xff]
      %v1047 = vld [vmem:[%s247 + $0x20] sm:$0xff]
      %v1048 = vld [vmem:[%s247 + $0x28] sm:$0xff]
      %v1049 = vld [vmem:[%s247 + $0x30] sm:$0xff]
      %v1050 = vld [vmem:[%s247 + $0x38] sm:$0xff]
      %v1051 = vld [vmem:[#allocation2 + $0x40] sm:$0xff]
      %v1052 = vld [vmem:[#allocation2 + $0x48] sm:$0xff]
      %v1053 = vld [vmem:[#allocation2 + $0x50] sm:$0xff]
      %v1054 = vld [vmem:[#allocation2 + $0x58] sm:$0xff]
      %v1055 = vld [vmem:[#allocation2 + $0x60] sm:$0xff]
      %v1056 = vld [vmem:[#allocation2 + $0x68] sm:$0xff]
      %v1057 = vld [vmem:[#allocation2 + $0x70] sm:$0xff]
      %v1058 = vld [vmem:[#allocation2 + $0x78] sm:$0xff]
      %v1059 = vmul.f32 %v1051, 0.5
      %v1060 = vmul.f32 %v1052, 0.5
      %v1061 = vmul.f32 %v1053, 0.5
      %v1062 = vmul.f32 %v1054, 0.5
      %v1063 = vmul.f32 %v1055, 0.5
      %v1064 = vmul.f32 %v1056, 0.5
      %v1065 = vmul.f32 %v1057, 0.5
      %v1066 = vmul.f32 %v1058, 0.5
      %v1067 = vtanh.pop %v1059
      %v1068 = vtanh.pop %v1060
      %v1069 = vtanh.pop %v1061
      %v1070 = vtanh.pop %v1062
      %v1071 = vtanh.pop %v1063
      %v1072 = vtanh.pop %v1064
      %v1073 = vtanh.pop %v1065
      %v1074 = vtanh.pop %v1066
      %v1075 = vmul.f32 %v1067, 0.5
      %v1076 = vmul.f32 %v1068, 0.5
      %v1077 = vmul.f32 %v1069, 0.5
      %v1078 = vmul.f32 %v1070, 0.5
      %v1079 = vmul.f32 %v1071, 0.5
      %v1080 = vmul.f32 %v1072, 0.5
      %v1081 = vmul.f32 %v1073, 0.5
      %v1082 = vmul.f32 %v1074, 0.5
      %v1083 = vadd.f32 %v1075, 0.5
      %v1084 = vadd.f32 %v1076, 0.5
      %v1085 = vadd.f32 %v1077, 0.5
      %v1086 = vadd.f32 %v1078, 0.5
      %v1087 = vadd.f32 %v1079, 0.5
      %v1088 = vadd.f32 %v1080, 0.5
      %v1089 = vadd.f32 %v1081, 0.5
      %v1090 = vadd.f32 %v1082, 0.5
      %v1091 = vmul.f32 %v1083, %v1043
      %v1092 = vmul.f32 %v1084, %v1044
      %v1093 = vmul.f32 %v1085, %v1045
      %v1094 = vmul.f32 %v1086, %v1046
      %v1095 = vmul.f32 %v1087, %v1047
      %v1096 = vmul.f32 %v1088, %v1048
      %v1097 = vmul.f32 %v1089, %v1049
      %v1098 = vmul.f32 %v1090, %v1050
      %v1099 = vld [vmem:[#allocation2] sm:$0xff]
      %v1100 = vld [vmem:[#allocation2 + $0x8] sm:$0xff]
      %v1101 = vld [vmem:[#allocation2 + $0x10] sm:$0xff]
      %v1102 = vld [vmem:[#allocation2 + $0x18] sm:$0xff]
      %v1103 = vld [vmem:[#allocation2 + $0x20] sm:$0xff]
      %v1104 = vld [vmem:[#allocation2 + $0x28] sm:$0xff]
      %v1105 = vld [vmem:[#allocation2 + $0x30] sm:$0xff]
      %v1106 = vld [vmem:[#allocation2 + $0x38] sm:$0xff]
      %v1107 = vmul.f32 %v1099, 0.5
      %v1108 = vmul.f32 %v1100, 0.5
      %v1109 = vmul.f32 %v1101, 0.5
      %v1110 = vmul.f32 %v1102, 0.5
      %v1111 = vmul.f32 %v1103, 0.5
      %v1112 = vmul.f32 %v1104, 0.5
      %v1113 = vmul.f32 %v1105, 0.5
      %v1114 = vmul.f32 %v1106, 0.5
      %v1115 = vtanh.pop %v1107
      %v1116 = vtanh.pop %v1108
      %v1117 = vtanh.pop %v1109
      %v1118 = vtanh.pop %v1110
      %v1119 = vtanh.pop %v1111
      %v1120 = vtanh.pop %v1112
      %v1121 = vtanh.pop %v1113
      %v1122 = vtanh.pop %v1114
      %v1123 = vmul.f32 %v1115, 0.5
      %v1124 = vmul.f32 %v1116, 0.5
      %v1125 = vmul.f32 %v1117, 0.5
      %v1126 = vmul.f32 %v1118, 0.5
      %v1127 = vmul.f32 %v1119, 0.5
      %v1128 = vmul.f32 %v1120, 0.5
      %v1129 = vmul.f32 %v1121, 0.5
      %v1130 = vmul.f32 %v1122, 0.5
      %v1131 = vadd.f32 %v1123, 0.5
      %v1132 = vadd.f32 %v1124, 0.5
      %v1133 = vadd.f32 %v1125, 0.5
      %v1134 = vadd.f32 %v1126, 0.5
      %v1135 = vadd.f32 %v1127, 0.5
      %v1136 = vadd.f32 %v1128, 0.5
      %v1137 = vadd.f32 %v1129, 0.5
      %v1138 = vadd.f32 %v1130, 0.5
      %v1139 = vld [vmem:[#allocation2 + $0xc0] sm:$0xff]
      %v1140 = vld [vmem:[#allocation2 + $0xc8] sm:$0xff]
      %v1141 = vld [vmem:[#allocation2 + $0xd0] sm:$0xff]
      %v1142 = vld [vmem:[#allocation2 + $0xd8] sm:$0xff]
      %v1143 = vld [vmem:[#allocation2 + $0xe0] sm:$0xff]
      %v1144 = vld [vmem:[#allocation2 + $0xe8] sm:$0xff]
      %v1145 = vld [vmem:[#allocation2 + $0xf0] sm:$0xff]
      %v1146 = vld [vmem:[#allocation2 + $0xf8] sm:$0xff]
      %v1147 = vtanh.pop %v1139
      %v1148 = vtanh.pop %v1140
      %v1149 = vtanh.pop %v1141
      %v1150 = vtanh.pop %v1142
      %v1151 = vtanh.pop %v1143
      %v1152 = vtanh.pop %v1144
      %v1153 = vtanh.pop %v1145
      %v1154 = vtanh.pop %v1146
      %v1155 = vmul.f32 %v1131, %v1147
      %v1156 = vmul.f32 %v1132, %v1148
      %v1157 = vmul.f32 %v1133, %v1149
      %v1158 = vmul.f32 %v1134, %v1150
      %v1159 = vmul.f32 %v1135, %v1151
      %v1160 = vmul.f32 %v1136, %v1152
      %v1161 = vmul.f32 %v1137, %v1153
      %v1162 = vmul.f32 %v1138, %v1154
      %v1163 = vadd.f32 %v1091, %v1155
      %v1164 = vadd.f32 %v1092, %v1156
      %v1165 = vadd.f32 %v1093, %v1157
      %v1166 = vadd.f32 %v1094, %v1158
      %v1167 = vadd.f32 %v1095, %v1159
      %v1168 = vadd.f32 %v1096, %v1160
      %v1169 = vadd.f32 %v1097, %v1161
      %v1170 = vadd.f32 %v1098, %v1162
      %1171 = vst [vmem:[%s257] sm:$0xff] %v1163
      %1172 = vst [vmem:[%s257 + $0x8] sm:$0xff] %v1164
      %1173 = vst [vmem:[%s257 + $0x10] sm:$0xff] %v1165
      %1174 = vst [vmem:[%s257 + $0x18] sm:$0xff] %v1166
      %1175 = vst [vmem:[%s257 + $0x20] sm:$0xff] %v1167
      %1176 = vst [vmem:[%s257 + $0x28] sm:$0xff] %v1168
      %1177 = vst [vmem:[%s257 + $0x30] sm:$0xff] %v1169
      %1178 = vst [vmem:[%s257 + $0x38] sm:$0xff] %v1170
      %v1179 = vld [vmem:[#allocation2 + $0x80] sm:$0xff]
      %v1180 = vld [vmem:[#allocation2 + $0x88] sm:$0xff]
      %v1181 = vld [vmem:[#allocation2 + $0x90] sm:$0xff]
      %v1182 = vld [vmem:[#allocation2 + $0x98] sm:$0xff]
      %v1183 = vld [vmem:[#allocation2 + $0xa0] sm:$0xff]
      %v1184 = vld [vmem:[#allocation2 + $0xa8] sm:$0xff]
      %v1185 = vld [vmem:[#allocation2 + $0xb0] sm:$0xff]
      %v1186 = vld [vmem:[#allocation2 + $0xb8] sm:$0xff]
      %v1187 = vmul.f32 %v1179, 0.5
      %v1188 = vmul.f32 %v1180, 0.5
      %v1189 = vmul.f32 %v1181, 0.5
      %v1190 = vmul.f32 %v1182, 0.5
      %v1191 = vmul.f32 %v1183, 0.5
      %v1192 = vmul.f32 %v1184, 0.5
      %v1193 = vmul.f32 %v1185, 0.5
      %v1194 = vmul.f32 %v1186, 0.5
      %v1195 = vtanh.pop %v1187
      %v1196 = vtanh.pop %v1188
      %v1197 = vtanh.pop %v1189
      %v1198 = vtanh.pop %v1190
      %v1199 = vtanh.pop %v1191
      %v1200 = vtanh.pop %v1192
      %v1201 = vtanh.pop %v1193
      %v1202 = vtanh.pop %v1194
      %v1203 = vmul.f32 %v1195, 0.5
      %v1204 = vmul.f32 %v1196, 0.5
      %v1205 = vmul.f32 %v1197, 0.5
      %v1206 = vmul.f32 %v1198, 0.5
      %v1207 = vmul.f32 %v1199, 0.5
      %v1208 = vmul.f32 %v1200, 0.5
      %v1209 = vmul.f32 %v1201, 0.5
      %v1210 = vmul.f32 %v1202, 0.5
      %v1211 = vadd.f32 %v1203, 0.5
      %v1212 = vadd.f32 %v1204, 0.5
      %v1213 = vadd.f32 %v1205, 0.5
      %v1214 = vadd.f32 %v1206, 0.5
      %v1215 = vadd.f32 %v1207, 0.5
      %v1216 = vadd.f32 %v1208, 0.5
      %v1217 = vadd.f32 %v1209, 0.5
      %v1218 = vadd.f32 %v1210, 0.5
      %v1219 = vtanh.pop %v1163
      %v1220 = vtanh.pop %v1164
      %v1221 = vtanh.pop %v1165
      %v1222 = vtanh.pop %v1166
      %v1223 = vtanh.pop %v1167
      %v1224 = vtanh.pop %v1168
      %v1225 = vtanh.pop %v1169
      %v1226 = vtanh.pop %v1170
      %v1227 = vmul.f32 %v1211, %v1219
      %v1228 = vmul.f32 %v1212, %v1220
      %v1229 = vmul.f32 %v1213, %v1221
      %v1230 = vmul.f32 %v1214, %v1222
      %v1231 = vmul.f32 %v1215, %v1223
      %v1232 = vmul.f32 %v1216, %v1224
      %v1233 = vmul.f32 %v1217, %v1225
      %v1234 = vmul.f32 %v1218, %v1226
      %1235 = vst [vmem:[%s252] sm:$0xff] %v1227
      %1236 = vst [vmem:[%s252 + $0x8] sm:$0xff] %v1228
      %1237 = vst [vmem:[%s252 + $0x10] sm:$0xff] %v1229
      %1238 = vst [vmem:[%s252 + $0x18] sm:$0xff] %v1230
      %1239 = vst [vmem:[%s252 + $0x20] sm:$0xff] %v1231
      %1240 = vst [vmem:[%s252 + $0x28] sm:$0xff] %v1232
      %1241 = vst [vmem:[%s252 + $0x30] sm:$0xff] %v1233
      %1242 = vst [vmem:[%s252 + $0x38] sm:$0xff] %v1234
      %p1243 = scmp.lt.s32.totalorder %s17, 1
      %s1244 = scalar_select %p1243, %s17, 1
      %s1245 = smul.addr %s1244, 8
      %s1246 = smul.addr %s1245, 8
      %s1247 = scalar_lea.vmem %s4, %s1246
      %p1248 = scmp.lt.s32.totalorder %s17, 1
      %s1249 = scalar_select %p1248, %s17, 1
      %s1250 = smul.addr %s1249, 8
      %s1251 = smul.addr %s1250, 8
      %s1252 = scalar_lea.vmem %s5, %s1251
      // Predicated region
      $region37: #{convlstm_cell_forward.1} parent=35 // pred_check
        %p1253 = pneg %p129
      $region38: #{convlstm_cell_forward.1} parent=35 // pred_check_branch
        %1255 = sbr.rel (%p1253) target = $region40
      $region39: #{convlstm_cell_forward.1} parent=35 // pred_region
        _
      $region40: #{convlstm_cell_forward.1} parent=35 // pred_fallthru
        _
      // Predicated region
      $region41: #{convlstm_cell_forward.1} parent=35 // pred_check
        %p1256 = pneg %p155
      $region42: #{convlstm_cell_forward.1} parent=35 // pred_check_branch
        %1258 = sbr.rel (%p1256) target = $region44
      $region43: #{convlstm_cell_forward.1} parent=35 // pred_region
        _
      $region44: #{convlstm_cell_forward.1} parent=35 // pred_fallthru
        _
    $region36: #{convlstm_cell_forward.1} parent=5 // pred_fallthru
      _
    %p1259 = scmp.le.s32.totalorder 2, %s12
    // Predicated region
    $region45: #{convlstm_cell_forward.1} parent=5 // pred_check
      %p1260 = pneg %p1259
    $region46: #{convlstm_cell_forward.1} parent=5 // pred_check_branch
      %1262 = sbr.rel (%p1260) target = $region48
    $region47: #{convlstm_cell_forward.1} parent=5 // pred_region
      %s1263 = ssub.s32 %s12, 2
      // Predicated region
      $region49: #{convlstm_cell_forward.1} parent=47 // pred_check
        %p1264 = pneg %p135
      $region50: #{convlstm_cell_forward.1} parent=47 // pred_check_branch
        %1266 = sbr.rel (%p1264) target = $region52
      $region51: #{convlstm_cell_forward.1} parent=47 // pred_region
        %p1267 = scmp.lt.s32.totalorder %s18, 1
        %s1268 = scalar_select %p1267, %s18, 1
        %s1269 = smul.addr %s1268, 8
        %s1270 = smul.addr %s1269, 8
        %s1271 = scalar_lea.vmem %s4, %s1270
      $region52: #{convlstm_cell_forward.1} parent=47 // pred_fallthru
        _
      // Predicated region
      $region53: #{convlstm_cell_forward.1} parent=47 // pred_check
        %p1272 = pneg %p161
      $region54: #{convlstm_cell_forward.1} parent=47 // pred_check_branch
        %1274 = sbr.rel (%p1272) target = $region56
      $region55: #{convlstm_cell_forward.1} parent=47 // pred_region
        %p1275 = scmp.lt.s32.totalorder %s18, 1
        %s1276 = scalar_select %p1275, %s18, 1
        %s1277 = smul.addr %s1276, 8
        %s1278 = smul.addr %s1277, 8
        %s1279 = scalar_lea.vmem %s5, %s1278
      $region56: #{convlstm_cell_forward.1} parent=47 // pred_fallthru
        _
    $region48: #{convlstm_cell_forward.1} parent=5 // pred_fallthru
      _
  $region6: #{convlstm_cell_forward.1} parent=0 // loop_footer
    %s16 = sadd.s32 1, %s12
  $region7: #{convlstm_cell_forward.1} parent=0 // loop_footer_branch
    %11 = sbr.rel target = $region3
  $region8: #{convlstm_cell_forward.1} parent=0 // loop_exit
    _

</llo_original>
